<compile_context>
chip_gen: v7x
topology: tpu7x:2x2x1
jax: 0.10.0
libtpu: 0.0.40
codegen_flags: <defaults>
</compile_context>

<pallas_src>
import jax
import jax.numpy as jnp
from jax.experimental import pallas as pl
from jax.experimental.pallas import tpu as pltpu


def debci_same_pad_layer(hidden_states, *, num_conv_pos_embeddings):
    """Forward pass of DeBCISamePadLayer.

    hidden_states: (B, C, L)
    returns (B, C, L - 1) if num_conv_pos_embeddings is even, else hidden_states.
    """
    num_pad_remove = 1 if num_conv_pos_embeddings % 2 == 0 else 0
    if num_pad_remove == 0:
        # Identity path: the module performs no computation and no data movement.
        return hidden_states

    B, C, L = hidden_states.shape
    L_out = L - num_pad_remove
    dtype = hidden_states.dtype
    itemsize = jnp.dtype(dtype).itemsize

    # dtype-aware sublane multiple (8 for f32, 16 for bf16, 32 for int8).
    sublane = {4: 8, 2: 16, 1: 32}.get(itemsize, 8)

    # ---- tile-size selection (VMEM budgeted, works on v5e/v6e/v7x) -------------
    M = B * C
    # Per row of a tile we hold one input row (L) and one output row (L_out),
    # each double-buffered by the BlockSpec pipeline.
    bytes_per_row = 2 * (L + L_out) * itemsize
    vmem_budget = 8 * 1024 * 1024  # conservative slice of scoped VMEM (v7x-safe)
    tile_m = max(sublane, min(1024, vmem_budget // max(1, bytes_per_row)))
    tile_m = (tile_m // sublane) * sublane
    m_rounded = ((M + sublane - 1) // sublane) * sublane
    tile_m = min(tile_m, m_rounded)

    M_pad = ((M + tile_m - 1) // tile_m) * tile_m
    grid_m = M_pad // tile_m

    x2d = hidden_states.reshape(M, L)
    if M_pad != M:
        x2d = jnp.pad(x2d, ((0, M_pad - M), (0, 0)))

    def _same_pad_kernel(x_ref, o_ref):
        # x_ref: (tile_m, L) ; o_ref: (tile_m, L_out).  Copy in native dtype,
        # dropping the last `num_pad_remove` lanes.
        o_ref[...] = x_ref[...][:, :L_out]

    out2d = pl.pallas_call(
        _same_pad_kernel,
        out_shape=jax.ShapeDtypeStruct((M_pad, L_out), dtype),
        grid=(grid_m,),
        in_specs=[pl.BlockSpec((tile_m, L), lambda i: (i, 0))],
        out_specs=pl.BlockSpec((tile_m, L_out), lambda i: (i, 0)),
        compiler_params=pltpu.CompilerParams(
            dimension_semantics=("parallel",),
            vmem_limit_bytes=64 * 1024 * 1024,
        ),
        cost_estimate=pl.CostEstimate(
            flops=0,
            transcendentals=0,
            bytes_accessed=int(M_pad * (L + L_out) * itemsize),
        ),
    )(x2d)

    return out2d[:M].reshape(B, C, L_out)


if __name__ == "__main__":
    # Small shapes consistent with the module: hidden_states is (batch, channels, length).
    B, C, L = 2, 4, 16
    num_conv_pos_embeddings = 16  # even -> num_pad_remove = 1

    key = jax.random.PRNGKey(0)
    x = jax.random.normal(key, (B, C, L), dtype=jnp.float32)

    out = jax.block_until_ready(
        debci_same_pad_layer(x, num_conv_pos_embeddings=num_conv_pos_embeddings))

    ref = x[:, :, :-1]
    assert out.shape == (B, C, L - 1), f"bad shape {out.shape}"
    assert jnp.array_equal(out, ref), "mismatch vs reference (even kernel size)"

    # Odd num_conv_pos_embeddings -> identity path.
    out_id = jax.block_until_ready(
        debci_same_pad_layer(x, num_conv_pos_embeddings=15))
    assert out_id.shape == x.shape
    assert jnp.array_equal(out_id, x), "identity path mismatch"

    print("KERNEL_OK")
</pallas_src>

<mosaic_0001>
module attributes {stable_mosaic.version = 11 : i64} {
  func.func @_same_pad_kernel(%arg0: i32, %arg1: memref<8x16xf32, #tpu.memory_space<vmem>>, %arg2: memref<8x15xf32, #tpu.memory_space<vmem>>) attributes {dimension_semantics = [#tpu.dimension_semantics<parallel>], iteration_bounds = array<i64: 1>, scalar_prefetch = 0 : i64, scratch_operands = 0 : i64, tpu.core_type = #tpu.core_type<tc>, window_params = [{transform_indices = @transform_0, window_bounds = array<i64: 8, 16>}, {transform_indices = @transform_1, window_bounds = array<i64: 8, 15>}]} {
    %c0 = arith.constant 0 : index
    %c0_0 = arith.constant 0 : index
    %0 = vector.load %arg1[%c0, %c0_0] : memref<8x16xf32, #tpu.memory_space<vmem>>, vector<8x16xf32>
    %1 = vector.extract_strided_slice %0 {offsets = [0, 0], sizes = [8, 15], strides = [1, 1]} : vector<8x16xf32> to vector<8x15xf32>
    %c0_1 = arith.constant 0 : index
    %c0_2 = arith.constant 0 : index
    %2 = vector.load %arg2[%c0_1, %c0_2] : memref<8x15xf32, #tpu.memory_space<vmem>>, vector<8x15xf32>
    tpu.vector_store %arg2[%c0_1, %c0_2], %1 {strides = array<i32>} : memref<8x15xf32, #tpu.memory_space<vmem>>, vector<8x15xf32>,
    return
  }
  func.func @transform_0(%arg0: i32) -> (i32, i32) {
    %c0_i32 = arith.constant 0 : i32
    %c0_i32_0 = arith.constant 0 : i32
    return %arg0, %c0_i32 : i32, i32
  }
  func.func @transform_1(%arg0: i32) -> (i32, i32) {
    %c0_i32 = arith.constant 0 : i32
    %c0_i32_0 = arith.constant 0 : i32
    return %arg0, %c0_i32 : i32, i32
  }
}

</mosaic_0001>

<llo_original>
// kernel: tpu_custom_call.1
$region0: #{tpu_custom_call.1}
  #allocation0 [shape = 'u32[]', space=smem, size = 0x4, offset = 0x4, fixed_abs, tag = 'smem constant byte address 0x4 - core index']
  #allocation1 [shape = 'u32[144,128]{1,0:T(1,128)}', space=vmem, size = 0x12000, scoped, tag = 'internal scratch']
  %s0 = inlined_call_operand.hbm [shape: f32[8,16], index: 0, kind: input, shape index: {}]
  %s1 = inlined_call_operand.hbm [shape: f32[8,15], index: 1, kind: output, shape index: {}]
  %s2 = sld [smem:[#allocation0]]
  $region18: #{tpu_custom_call.1} parent=0
    _
  %s4 = ssub.s32 1, %s2
  %s5 = scalar_select 0, %s4, %s2
  $region1: #{tpu_custom_call.1} parent=0
    #allocation2 [shape = 'u8[4096]{0}', space=vmem, size = 0x1000, scoped, tag = 'input window, operand 0, single buffered']
    #allocation3 [shape = 's32[1]{0}', space=sflag, size = 0x4, scoped, tag = 'scoped memory for tpu_custom_call.1']
    #allocation4 [shape = 's32[1]{0}', space=sflag, size = 0x4, scoped, tag = 'scoped memory for tpu_custom_call.1']
    #allocation5 [shape = 'u8[4096]{0}', space=vmem, size = 0x1000, scoped, tag = 'output window, operand 0, single buffered']
    %6 = vsyncpa [#allocation3], 0
    %7 = vsyncpa [#allocation4], 0
    // Predicated region
    $region2: #{tpu_custom_call.1} parent=1 // pred_check
      _
    $region3: #{tpu_custom_call.1} parent=1 // pred_check_branch
      %9 = sbr.rel (0) target = $region5
    $region4: #{tpu_custom_call.1} parent=1 // pred_region
      %s11 = ssub.s32 128, 128
      %12 = vsyncadd [#allocation3], %s11
      %s14 = sshll.u32 [#allocation2], 4
      %s15 = int_to_ptr.vmem [resolvable:$true] %s14
      %17 = dma.hbm_to_vmem [thread:$0]  %s0, 128, %s15, [#allocation3]
    $region5: #{tpu_custom_call.1} parent=1 // pred_fallthru
      _
    // Predicated region
    $region6: #{tpu_custom_call.1} parent=1 // pred_check
      _
    $region7: #{tpu_custom_call.1} parent=1 // pred_check_branch
      %19 = sbr.rel (0) target = $region9
    $region8: #{tpu_custom_call.1} parent=1 // pred_region
      %20 = dma.done [#allocation3], 128
    $region9: #{tpu_custom_call.1} parent=1 // pred_fallthru
      _
    %v21 = vld [vmem:[#allocation2] sm:$0xff]
    %vm22 = vcmask 121856
    %23 = vst.msk [vmem:[#allocation5] sm:$0xff] %vm22, %v21
    // Predicated region
    $region10: #{tpu_custom_call.1} parent=1 // pred_check
      _
    $region11: #{tpu_custom_call.1} parent=1 // pred_check_branch
      %25 = sbr.rel (0) target = $region13
    $region12: #{tpu_custom_call.1} parent=1 // pred_region
      %s27 = ssub.s32 128, 128
      %28 = vsyncadd [#allocation4], %s27
      %s30 = sshll.u32 [#allocation5], 4
      %s31 = int_to_ptr.vmem [resolvable:$true] %s30
      %33 = dma.vmem_to_hbm [thread:$0]  %s31, 128, %s1, [#allocation4]
    $region13: #{tpu_custom_call.1} parent=1 // pred_fallthru
      _
    // Predicated region
    $region14: #{tpu_custom_call.1} parent=1 // pred_check
      _
    $region15: #{tpu_custom_call.1} parent=1 // pred_check_branch
      %35 = sbr.rel (0) target = $region17
    $region16: #{tpu_custom_call.1} parent=1 // pred_region
      %36 = dma.done [#allocation4], 128
    $region17: #{tpu_custom_call.1} parent=1 // pred_fallthru
      _
    %37 = vsyncpa [#allocation3], 1
    %38 = vsyncpa [#allocation4], 1

</llo_original>
